<compile_context>
chip_gen: v7x
topology: tpu7x:2x2x1
jax: 0.10.0
libtpu: 0.0.40
codegen_flags: <defaults>
</compile_context>

<pallas_src>
import functools

import numpy as np
import jax
import jax.numpy as jnp
from jax import lax
from jax.experimental import pallas as pl
from jax.experimental.pallas import tpu as pltpu


def _padding(downsample, kernel_size):
    """Same padding rule as the PyTorch reference."""
    return max(0, int(np.floor((kernel_size - downsample + 1) / 2)))


def _round_up(v, m):
    return (v + m - 1) // m * m


# --------------------------------------------------------------------------- #
# Fused kernel: one grid step = (batch element b, output-length tile l).       #
# All ref accesses use static indices / static dense lane slices.              #
# --------------------------------------------------------------------------- #
def _resblock_kernel(x_ref, y_ref, w1_ref, wc_ref, b1_ref, s2_ref, b2_ref,
                     xo_ref, yo_ref, *, k, s, To, Q, p2, L1, has_skip_conv,
                     need_mask):
    cdt = x_ref.dtype                      # matmul operand dtype (f32 or bf16)

    # Global h1 position of (phase r, column q) is  l*To*s - p2 + q*s + r.
    # Positions outside [0, L1) are conv2's zero padding -> must be exactly 0.
    if need_mask:
        base = pl.program_id(1) * (To * s)
        qpos = lax.broadcasted_iota(jnp.int32, (1, Q), 1) * s + (base - p2)

    # ---- stage 1: conv1 + BN1 + ReLU, computed phase-split -------------------
    # One im2col matmul per output phase r: every slice is a dense static lane
    # slice of the phase-deinterleaved x window (no strided gathers).
    h1 = []
    for r in range(s):
        taps = []
        for t in range(k):
            rp, a = (r + t) % s, (r + t) // s
            taps.append(x_ref[0, 0, rp, :, a:a + Q])
        xcol = jnp.concatenate(taps, axis=0) if k > 1 else taps[0]
        h = jnp.dot(w1_ref[...], xcol, preferred_element_type=jnp.float32)
        h = jnp.maximum(h + b1_ref[...], 0.0)          # BN1 scale folded in W1
        if need_mask:
            jp = qpos + r
            h = jnp.where((jp >= 0) & (jp < L1), h, 0.0)
        h1.append(h.astype(cdt))                       # stays in vregs / VMEM

    # ---- skip path: MaxPool1d(s, s) as a max over s dense phase slices -------
    ym = y_ref[0, 0, :, :]                             # residual kept in f32
    for t in range(1, s):
        ym = jnp.maximum(ym, y_ref[0, t, :, :])

    # ---- stage 2: strided conv2 (+ fused 1x1 skip conv) as ONE matmul --------
    taps = []
    for t in range(k):
        r, a = t % s, t // s
        taps.append(h1[r][:, a:a + To])                # dense static slices
    if has_skip_conv:
        taps.append(ym.astype(cdt))        # 1x1 skip conv rides the same MXU op
    hcol = jnp.concatenate(taps, axis=0) if len(taps) > 1 else taps[0]
    pre = jnp.dot(wc_ref[...], hcol, preferred_element_type=jnp.float32)
    if not has_skip_conv:
        pre = pre + ym                     # identity skip: full-precision add

    yo_ref[0, :, :] = pre.astype(yo_ref.dtype)                  # y = pre-BN2 sum
    xo_ref[0, :, :] = jnp.maximum(pre * s2_ref[...] + b2_ref[...], 0.0
                                  ).astype(xo_ref.dtype)        # BN2 + ReLU


# --------------------------------------------------------------------------- #
# Wrapper                                                                      #
# --------------------------------------------------------------------------- #
def resblock1d_forward(x, y, params, *, downsample, kernel_size, eps=1e-5,
                       compute_dtype=jnp.bfloat16, out_dtype=jnp.float32,
                       lane_tile=1024, vmem_limit_bytes=None):
    """Eval-mode ResBlock1d forward.  x, y: (N, C_in, L)."""
    w1, w2, w_skip = params["w1"], params["w2"], params["w_skip"]
    bn1, bn2 = params["bn1"], params["bn2"]

    N, c_in, L = x.shape
    c_out = w1.shape[0]
    k, s = int(kernel_size), int(downsample)
    if k % 2 == 0:
        raise ValueError("only odd kernel_size is supported")
    p1, p2 = _padding(1, k), _padding(s, k)
    L1 = L + 2 * p1 - k + 1            # conv1 output length (== L for odd k)
    Lo = (L1 + 2 * p2 - k) // s + 1    # block output length
    if s > 1 and (L - s) // s + 1 != Lo:
        # Documented restriction: MaxPool1d and conv2 output lengths must match
        # for the residual add (PyTorch would also fail to broadcast here).
        raise ValueError("MaxPool1d / conv2 output lengths differ for this "
                         f"(L={L}, kernel_size={k}, downsample={s})")

    # Channel padding to sublane-friendly multiples of 8 (zero rows/cols are
    # cropped from the outputs and contribute nothing to the matmuls).
    c_in_p, c_out_p = _round_up(c_in, 8), _round_up(c_out, 8)

    # Output-length tiling: tiles are ALWAYS lane-dense multiples of 128
    # (pad + crop when Lo is small) so output stores are full unmasked vst.
    lane_tile = max(128, _round_up(lane_tile, 128))
    if Lo <= lane_tile:
        To, nT = _round_up(Lo, 128), 1
    else:
        To, nT = lane_tile, -(-Lo // lane_tile)
    Lo_pad = nT * To
    Q = To + (k - 1) // s                  # conv1 columns needed per phase
    Lx_phase = Q + (k + s - 2) // s        # x columns needed per phase (w/ halo)

    # ---- fold BatchNorm (eval, running stats) ------------------------------
    def fold(bn):
        g, b, m, v = bn
        sc = (g / jnp.sqrt(v + eps)).astype(jnp.float32)
        return sc, (b - m * sc).astype(jnp.float32)

    scale1, bias1 = fold(bn1)
    scale2, bias2 = fold(bn2)

    def col_vec(v):
        return jnp.pad(v, (0, c_out_p - c_out)).reshape(c_out_p, 1)

    b1v, s2v, b2v = col_vec(bias1), col_vec(scale2), col_vec(bias2)

    # ---- weights: BN1 scale folded into w1; tap-major im2col layout ---------
    w1f = jnp.pad(w1 * scale1[:, None, None],
                  ((0, c_out_p - c_out), (0, c_in_p - c_in), (0, 0)))
    W1 = jnp.transpose(w1f, (0, 2, 1)).reshape(c_out_p, k * c_in_p)

    w2p = jnp.pad(w2, ((0, c_out_p - c_out), (0, c_out_p - c_out), (0, 0)))
    W2 = jnp.transpose(w2p, (0, 2, 1)).reshape(c_out_p, k * c_out_p)

    has_skip_conv = w_skip is not None
    if has_skip_conv:
        Wsk = jnp.pad(w_skip, ((0, c_out_p - c_out), (0, c_in_p - c_in)))
        Wc = jnp.concatenate([W2, Wsk], axis=1)       # skip 1x1 fused into conv2
    else:
        if c_in != c_out:
            raise ValueError("identity skip needs n_filters_in == n_filters_out")
        Wc = W2
    W1 = W1.astype(compute_dtype)
    Wc = Wc.astype(compute_dtype)

    # ---- activations: pad once, phase-deinterleave, build per-tile windows --
    pad_left = p1 + p2                                  # absorbs both conv pads
    Li_total = max((nT - 1) * To + Lx_phase, -(-(pad_left + L) // s))
    xp = jnp.pad(x, ((0, 0), (0, c_in_p - c_in),
                     (pad_left, Li_total * s - pad_left - L))
                 ).astype(compute_dtype)
    # xq[b, p, c, i] = xp[b, c, i*s + p]   (phase-deinterleaved)
    xq = xp.reshape(N, c_in_p, Li_total, s).transpose(0, 3, 1, 2)
    # Overlapping per-tile windows (tiny halo duplicated once in HBM) so the
    # kernel only DMAs O(c_in_p * To) bytes per grid step.
    xw = jnp.stack([lax.slice_in_dim(xq, l * To, l * To + Lx_phase, axis=3)
                    for l in range(nT)], axis=1)       # (N, nT, s, c_in_p, Lxp)

    # Residual stream stays float32 (pre-BN2 sum fidelity across stacked blocks).
    y_need = Lo_pad * s
    yp = jnp.pad(y, ((0, 0), (0, c_in_p - c_in), (0, max(0, y_need - L)))
                 )[:, :, :y_need].astype(jnp.float32)
    yq = yp.reshape(N, c_in_p, Lo_pad, s).transpose(0, 3, 1, 2)  # (N,s,c,Lo_pad)

    # ---- VMEM budget: raise scoped limit only when the tile needs it --------
    if vmem_limit_bytes is None:
        cb = jnp.dtype(compute_dtype).itemsize
        ob = jnp.dtype(out_dtype).itemsize
        est = (2 * cb * s * c_in_p * Lx_phase          # x window (double-buffered)
               + 2 * 4 * s * c_in_p * To               # y window (f32, double-buf)
               + cb * (W1.size + Wc.size)              # weights (single-buffered)
               + cb * k * c_in_p * Q                   # conv1 im2col temp
               + (4 + cb) * s * c_out_p * Q            # h1 phases (f32 + cast)
               + cb * Wc.shape[1] * To                 # conv2 im2col temp
               + 4 * c_out_p * To                      # pre-activation (f32)
               + 2 * 2 * ob * c_out_p * To)            # two outputs, double-buf
        if est > 32 * 1024 * 1024:
            try:
                cap = pltpu.get_tpu_info().vmem_capacity_bytes
            except Exception:                          # pragma: no cover
                cap = 64 * 1024 * 1024                 # conservative (v7x per-TC)
            vmem_limit_bytes = int(min(2 * est, cap - 8 * 1024 * 1024))

    kernel = functools.partial(
        _resblock_kernel, k=k, s=s, To=To, Q=Q, p2=p2, L1=L1,
        has_skip_conv=has_skip_conv, need_mask=(p2 > 0))

    const = dict(pipeline_mode=pl.Buffered(1))         # no double-buffering for
                                                        # constant-index operands
    x_out, y_out = pl.pallas_call(
        kernel,
        out_shape=(jax.ShapeDtypeStruct((N, c_out_p, Lo_pad), out_dtype),
                   jax.ShapeDtypeStruct((N, c_out_p, Lo_pad), out_dtype)),
        grid=(N, nT),
        in_specs=[
            pl.BlockSpec((1, 1, s, c_in_p, Lx_phase), lambda b, l: (b, l, 0, 0, 0)),
            pl.BlockSpec((1, s, c_in_p, To), lambda b, l: (b, 0, 0, l)),
            pl.BlockSpec((c_out_p, k * c_in_p), lambda b, l: (0, 0), **const),
            pl.BlockSpec(Wc.shape, lambda b, l: (0, 0), **const),
            pl.BlockSpec((c_out_p, 1), lambda b, l: (0, 0), **const),
            pl.BlockSpec((c_out_p, 1), lambda b, l: (0, 0), **const),
            pl.BlockSpec((c_out_p, 1), lambda b, l: (0, 0), **const),
        ],
        out_specs=[
            pl.BlockSpec((1, c_out_p, To), lambda b, l: (b, 0, l)),
            pl.BlockSpec((1, c_out_p, To), lambda b, l: (b, 0, l)),
        ],
        compiler_params=pltpu.CompilerParams(
            dimension_semantics=("parallel", "parallel"),
            vmem_limit_bytes=vmem_limit_bytes),
    )(xw, yq, W1, Wc, b1v, s2v, b2v)

    return x_out[:, :c_out, :Lo], y_out[:, :c_out, :Lo]


# --------------------------------------------------------------------------- #
# Pure-JAX reference (eval-mode semantics) for verification                    #
# --------------------------------------------------------------------------- #
def ref_forward(x, y, params, *, downsample, kernel_size, eps=1e-5):
    w1, w2, w_skip = params["w1"], params["w2"], params["w_skip"]
    bn1, bn2 = params["bn1"], params["bn2"]
    s, k = downsample, kernel_size
    p1, p2 = _padding(1, k), _padding(s, k)

    def conv(v, w, stride, pad):
        return lax.conv_general_dilated(v, w, (stride,), [(pad, pad)],
                                        dimension_numbers=("NCH", "OIH", "NCH"))

    def bn(v, p):
        g, b, m, var = p
        return ((v - m[None, :, None]) / jnp.sqrt(var[None, :, None] + eps)
                * g[None, :, None] + b[None, :, None])

    ys = y
    if s > 1:
        ys = lax.reduce_window(ys, -jnp.inf, lax.max,
                               (1, 1, s), (1, 1, s), "VALID")
    if w_skip is not None:
        ys = conv(ys, w_skip[:, :, None], 1, 0)

    h = jnp.maximum(bn(conv(x, w1, 1, p1), bn1), 0.0)
    h = conv(h, w2, s, p2)
    h = h + ys
    y_out = h
    x_out = jnp.maximum(bn(h, bn2), 0.0)
    return x_out, y_out


def _make_params(key, c_in, c_out, k, with_skip):
    ks = jax.random.split(key, 12)
    return {
        "w1": jax.random.normal(ks[0], (c_out, c_in, k), jnp.float32) * 0.1,
        "w2": jax.random.normal(ks[1], (c_out, c_out, k), jnp.float32) * 0.1,
        "w_skip": (jax.random.normal(ks[2], (c_out, c_in), jnp.float32) * 0.1
                   if with_skip else None),
        "bn1": (0.5 + jax.random.uniform(ks[3], (c_out,), jnp.float32),
                jax.random.normal(ks[4], (c_out,), jnp.float32) * 0.1,
                jax.random.normal(ks[5], (c_out,), jnp.float32) * 0.1,
                0.5 + jax.random.uniform(ks[6], (c_out,), jnp.float32)),
        "bn2": (0.5 + jax.random.uniform(ks[7], (c_out,), jnp.float32),
                jax.random.normal(ks[8], (c_out,), jnp.float32) * 0.1,
                jax.random.normal(ks[9], (c_out,), jnp.float32) * 0.1,
                0.5 + jax.random.uniform(ks[10], (c_out,), jnp.float32)),
    }, ks[11]


if __name__ == "__main__":
    key = jax.random.PRNGKey(0)

    # Config A: ResBlock1d(4, 8, downsample=2, kernel_size=3, dropout=0.1)
    N, C_IN, C_OUT, L, DS, K = 2, 4, 8, 16, 2, 3
    key, sub = jax.random.split(key)
    params_a, xkey = _make_params(sub, C_IN, C_OUT, K, with_skip=True)
    x_a = jax.random.normal(xkey, (N, C_IN, L), jnp.float32)
    y_a = x_a

    xr, yr = ref_forward(x_a, y_a, params_a, downsample=DS, kernel_size=K)

    # f32 matmul operands: tight tolerance.
    xo, yo = resblock1d_forward(x_a, y_a, params_a, downsample=DS,
                                kernel_size=K, compute_dtype=jnp.float32)
    jax.block_until_ready((xo, yo))
    np.testing.assert_allclose(np.asarray(xo), np.asarray(xr), rtol=1e-4, atol=1e-4)
    np.testing.assert_allclose(np.asarray(yo), np.asarray(yr), rtol=1e-4, atol=1e-4)

    # Default path: bf16 matmul operands, f32 accumulation / residual / outputs.
    xo16, yo16 = resblock1d_forward(x_a, y_a, params_a, downsample=DS, kernel_size=K)
    jax.block_until_ready((xo16, yo16))
    np.testing.assert_allclose(np.asarray(xo16), np.asarray(xr), rtol=5e-2, atol=5e-2)
    np.testing.assert_allclose(np.asarray(yo16), np.asarray(yr), rtol=5e-2, atol=5e-2)

    # Config B: identity skip (n_filters_in == n_filters_out, downsample == 1).
    N2, C2, L2, DS2, K2 = 2, 8, 16, 1, 3
    key, sub = jax.random.split(key)
    params_b, xkey_b = _make_params(sub, C2, C2, K2, with_skip=False)
    x_b = jax.random.normal(xkey_b, (N2, C2, L2), jnp.float32)
    y_b = x_b
    xo_b, yo_b = resblock1d_forward(x_b, y_b, params_b, downsample=DS2,
                                    kernel_size=K2, compute_dtype=jnp.float32)
    jax.block_until_ready((xo_b, yo_b))
    xr_b, yr_b = ref_forward(x_b, y_b, params_b, downsample=DS2, kernel_size=K2)
    np.testing.assert_allclose(np.asarray(xo_b), np.asarray(xr_b), rtol=1e-4, atol=1e-4)
    np.testing.assert_allclose(np.asarray(yo_b), np.asarray(yr_b), rtol=1e-4, atol=1e-4)

    print("KERNEL_OK")
</pallas_src>

<mosaic_0001>
module attributes {stable_mosaic.version = 11 : i64} {
  func.func @_resblock_kernel(%arg0: i32, %arg1: i32, %arg2: memref<1x1x2x8x130xf32, #tpu.memory_space<vmem>>, %arg3: memref<1x2x8x128xf32, #tpu.memory_space<vmem>>, %arg4: memref<8x24xf32, #tpu.memory_space<vmem>>, %arg5: memref<8x32xf32, #tpu.memory_space<vmem>>, %arg6: memref<8x1xf32, #tpu.memory_space<vmem>>, %arg7: memref<8x1xf32, #tpu.memory_space<vmem>>, %arg8: memref<8x1xf32, #tpu.memory_space<vmem>>, %arg9: memref<1x8x128xf32, #tpu.memory_space<vmem>>, %arg10: memref<1x8x128xf32, #tpu.memory_space<vmem>>) attributes {dimension_semantics = [#tpu.dimension_semantics<parallel>, #tpu.dimension_semantics<parallel>], iteration_bounds = array<i64: 2, 1>, scalar_prefetch = 0 : i64, scratch_operands = 0 : i64, tpu.core_type = #tpu.core_type<tc>, window_params = [{transform_indices = @transform_0, window_bounds = array<i64: 1, 1, 2, 8, 130>}, {transform_indices = @transform_1, window_bounds = array<i64: 1, 2, 8, 128>}, {pipeline_mode = #tpu.pipeline_mode<synchronous>, transform_indices = @transform_2, window_bounds = array<i64: 8, 24>}, {pipeline_mode = #tpu.pipeline_mode<synchronous>, transform_indices = @transform_3, window_bounds = array<i64: 8, 32>}, {pipeline_mode = #tpu.pipeline_mode<synchronous>, transform_indices = @transform_4, window_bounds = array<i64: 8, 1>}, {pipeline_mode = #tpu.pipeline_mode<synchronous>, transform_indices = @transform_5, window_bounds = array<i64: 8, 1>}, {pipeline_mode = #tpu.pipeline_mode<synchronous>, transform_indices = @transform_6, window_bounds = array<i64: 8, 1>}, {transform_indices = @transform_7, window_bounds = array<i64: 1, 8, 128>}, {transform_indices = @transform_8, window_bounds = array<i64: 1, 8, 128>}]} {
    %c256_i32 = arith.constant 256 : i32
    %0 = arith.muli %arg1, %c256_i32 : i32
    %1 = tpu.iota {dimensions = array<i32: 1>} : vector<1x129xi32>
    %c2_i32 = arith.constant 2 : i32
    %2 = vector.broadcast %c2_i32 : i32 to vector<1x129xi32>
    %3 = arith.muli %1, %2 : vector<1x129xi32>
    %c1_i32 = arith.constant 1 : i32
    %4 = arith.subi %0, %c1_i32 : i32
    %5 = vector.broadcast %4 : i32 to vector<1x129xi32>
    %6 = arith.addi %3, %5 : vector<1x129xi32>
    %c0 = arith.constant 0 : index
    %c0_0 = arith.constant 0 : index
    %c0_1 = arith.constant 0 : index
    %c0_2 = arith.constant 0 : index
    %c0_3 = arith.constant 0 : index
    %7 = vector.load %arg2[%c0, %c0_0, %c0_1, %c0_2, %c0_3] : memref<1x1x2x8x130xf32, #tpu.memory_space<vmem>>, vector<1x1x1x8x129xf32>
    %8 = vector.shape_cast %7 : vector<1x1x1x8x129xf32> to vector<8x129xf32>
    %c0_4 = arith.constant 0 : index
    %c0_5 = arith.constant 0 : index
    %c1 = arith.constant 1 : index
    %c0_6 = arith.constant 0 : index
    %c0_7 = arith.constant 0 : index
    %9 = vector.load %arg2[%c0_4, %c0_5, %c1, %c0_6, %c0_7] : memref<1x1x2x8x130xf32, #tpu.memory_space<vmem>>, vector<1x1x1x8x129xf32>
    %10 = vector.shape_cast %9 : vector<1x1x1x8x129xf32> to vector<8x129xf32>
    %c0_8 = arith.constant 0 : index
    %c0_9 = arith.constant 0 : index
    %c0_10 = arith.constant 0 : index
    %c0_11 = arith.constant 0 : index
    %c1_12 = arith.constant 1 : index
    %11 = vector.load %arg2[%c0_8, %c0_9, %c0_10, %c0_11, %c1_12] : memref<1x1x2x8x130xf32, #tpu.memory_space<vmem>>, vector<1x1x1x8x129xf32>
    %12 = vector.shape_cast %11 : vector<1x1x1x8x129xf32> to vector<8x129xf32>
    %13 = tpu.concatenate %8, %10, %12 in 0 : vector<8x129xf32>, vector<8x129xf32>, vector<8x129xf32> -> vector<24x129xf32>
    %c0_13 = arith.constant 0 : index
    %c0_14 = arith.constant 0 : index
    %14 = vector.load %arg4[%c0_13, %c0_14] : memref<8x24xf32, #tpu.memory_space<vmem>>, vector<8x24xf32>
    %cst = arith.constant dense<0.000000e+00> : vector<8x129xf32>
    %15 = tpu.matmul %14, %13, %cst {dimension_numbers = #tpu.dot_dimension_numbers<[1], [0], [0], [1], [0, 0, 1, 1], [], []>} : vector<8x24xf32>, vector<24x129xf32>, vector<8x129xf32> -> vector<8x129xf32>
    %c0_15 = arith.constant 0 : index
    %c0_16 = arith.constant 0 : index
    %16 = vector.load %arg6[%c0_15, %c0_16] : memref<8x1xf32, #tpu.memory_space<vmem>>, vector<8x1xf32>
    %17 = vector.broadcast %16 : vector<8x1xf32> to vector<8x129xf32>
    %18 = arith.addf %15, %17 : vector<8x129xf32>
    %cst_17 = arith.constant 0.000000e+00 : f32
    %19 = vector.broadcast %cst_17 : f32 to vector<8x129xf32>
    %20 = arith.maximumf %18, %19 : vector<8x129xf32>
    %c0_i32 = arith.constant 0 : i32
    %21 = vector.broadcast %c0_i32 : i32 to vector<1x129xi32>
    %22 = arith.addi %6, %21 : vector<1x129xi32>
    %c0_i32_18 = arith.constant 0 : i32
    %23 = vector.broadcast %c0_i32_18 : i32 to vector<1x129xi32>
    %24 = arith.cmpi sge, %22, %23 : vector<1x129xi32>
    %c16_i32 = arith.constant 16 : i32
    %25 = vector.broadcast %c16_i32 : i32 to vector<1x129xi32>
    %26 = arith.cmpi slt, %22, %25 : vector<1x129xi32>
    %27 = arith.andi %24, %26 : vector<1x129xi1>
    %cst_19 = arith.constant 0.000000e+00 : f32
    %28 = vector.shape_cast %27 : vector<1x129xi1> to vector<1x129xi1>
    %29 = vector.broadcast %28 : vector<1x129xi1> to vector<8x129xi1>
    %30 = vector.broadcast %cst_19 : f32 to vector<8x129xf32>
    %31 = arith.select %29, %20, %30 : vector<8x129xi1>, vector<8x129xf32>
    %c0_20 = arith.constant 0 : index
    %c0_21 = arith.constant 0 : index
    %c1_22 = arith.constant 1 : index
    %c0_23 = arith.constant 0 : index
    %c0_24 = arith.constant 0 : index
    %32 = vector.load %arg2[%c0_20, %c0_21, %c1_22, %c0_23, %c0_24] : memref<1x1x2x8x130xf32, #tpu.memory_space<vmem>>, vector<1x1x1x8x129xf32>
    %33 = vector.shape_cast %32 : vector<1x1x1x8x129xf32> to vector<8x129xf32>
    %c0_25 = arith.constant 0 : index
    %c0_26 = arith.constant 0 : index
    %c0_27 = arith.constant 0 : index
    %c0_28 = arith.constant 0 : index
    %c1_29 = arith.constant 1 : index
    %34 = vector.load %arg2[%c0_25, %c0_26, %c0_27, %c0_28, %c1_29] : memref<1x1x2x8x130xf32, #tpu.memory_space<vmem>>, vector<1x1x1x8x129xf32>
    %35 = vector.shape_cast %34 : vector<1x1x1x8x129xf32> to vector<8x129xf32>
    %c0_30 = arith.constant 0 : index
    %c0_31 = arith.constant 0 : index
    %c1_32 = arith.constant 1 : index
    %c0_33 = arith.constant 0 : index
    %c1_34 = arith.constant 1 : index
    %36 = vector.load %arg2[%c0_30, %c0_31, %c1_32, %c0_33, %c1_34] : memref<1x1x2x8x130xf32, #tpu.memory_space<vmem>>, vector<1x1x1x8x129xf32>
    %37 = vector.shape_cast %36 : vector<1x1x1x8x129xf32> to vector<8x129xf32>
    %38 = tpu.concatenate %33, %35, %37 in 0 : vector<8x129xf32>, vector<8x129xf32>, vector<8x129xf32> -> vector<24x129xf32>
    %c0_35 = arith.constant 0 : index
    %c0_36 = arith.constant 0 : index
    %39 = vector.load %arg4[%c0_35, %c0_36] : memref<8x24xf32, #tpu.memory_space<vmem>>, vector<8x24xf32>
    %cst_37 = arith.constant dense<0.000000e+00> : vector<8x129xf32>
    %40 = tpu.matmul %39, %38, %cst_37 {dimension_numbers = #tpu.dot_dimension_numbers<[1], [0], [0], [1], [0, 0, 1, 1], [], []>} : vector<8x24xf32>, vector<24x129xf32>, vector<8x129xf32> -> vector<8x129xf32>
    %c0_38 = arith.constant 0 : index
    %c0_39 = arith.constant 0 : index
    %41 = vector.load %arg6[%c0_38, %c0_39] : memref<8x1xf32, #tpu.memory_space<vmem>>, vector<8x1xf32>
    %42 = vector.broadcast %41 : vector<8x1xf32> to vector<8x129xf32>
    %43 = arith.addf %40, %42 : vector<8x129xf32>
    %cst_40 = arith.constant 0.000000e+00 : f32
    %44 = vector.broadcast %cst_40 : f32 to vector<8x129xf32>
    %45 = arith.maximumf %43, %44 : vector<8x129xf32>
    %c1_i32_41 = arith.constant 1 : i32
    %46 = vector.broadcast %c1_i32_41 : i32 to vector<1x129xi32>
    %47 = arith.addi %6, %46 : vector<1x129xi32>
    %c0_i32_42 = arith.constant 0 : i32
    %48 = vector.broadcast %c0_i32_42 : i32 to vector<1x129xi32>
    %49 = arith.cmpi sge, %47, %48 : vector<1x129xi32>
    %c16_i32_43 = arith.constant 16 : i32
    %50 = vector.broadcast %c16_i32_43 : i32 to vector<1x129xi32>
    %51 = arith.cmpi slt, %47, %50 : vector<1x129xi32>
    %52 = arith.andi %49, %51 : vector<1x129xi1>
    %cst_44 = arith.constant 0.000000e+00 : f32
    %53 = vector.shape_cast %52 : vector<1x129xi1> to vector<1x129xi1>
    %54 = vector.broadcast %53 : vector<1x129xi1> to vector<8x129xi1>
    %55 = vector.broadcast %cst_44 : f32 to vector<8x129xf32>
    %56 = arith.select %54, %45, %55 : vector<8x129xi1>, vector<8x129xf32>
    %c0_45 = arith.constant 0 : index
    %c0_46 = arith.constant 0 : index
    %c0_47 = arith.constant 0 : index
    %c0_48 = arith.constant 0 : index
    %57 = vector.load %arg3[%c0_45, %c0_46, %c0_47, %c0_48] : memref<1x2x8x128xf32, #tpu.memory_space<vmem>>, vector<1x1x8x128xf32>
    %58 = vector.shape_cast %57 : vector<1x1x8x128xf32> to vector<8x128xf32>
    %c0_49 = arith.constant 0 : index
    %c1_50 = arith.constant 1 : index
    %c0_51 = arith.constant 0 : index
    %c0_52 = arith.constant 0 : index
    %59 = vector.load %arg3[%c0_49, %c1_50, %c0_51, %c0_52] : memref<1x2x8x128xf32, #tpu.memory_space<vmem>>, vector<1x1x8x128xf32>
    %60 = vector.shape_cast %59 : vector<1x1x8x128xf32> to vector<8x128xf32>
    %61 = arith.maximumf %58, %60 : vector<8x128xf32>
    %62 = vector.extract_strided_slice %31 {offsets = [0, 0], sizes = [8, 128], strides = [1, 1]} : vector<8x129xf32> to vector<8x128xf32>
    %63 = vector.extract_strided_slice %56 {offsets = [0, 0], sizes = [8, 128], strides = [1, 1]} : vector<8x129xf32> to vector<8x128xf32>
    %64 = vector.extract_strided_slice %31 {offsets = [0, 1], sizes = [8, 128], strides = [1, 1]} : vector<8x129xf32> to vector<8x128xf32>
    %65 = tpu.concatenate %62, %63, %64, %61 in 0 : vector<8x128xf32>, vector<8x128xf32>, vector<8x128xf32>, vector<8x128xf32> -> vector<32x128xf32>
    %c0_53 = arith.constant 0 : index
    %c0_54 = arith.constant 0 : index
    %66 = vector.load %arg5[%c0_53, %c0_54] : memref<8x32xf32, #tpu.memory_space<vmem>>, vector<8x32xf32>
    %cst_55 = arith.constant dense<0.000000e+00> : vector<8x128xf32>
    %67 = tpu.matmul %66, %65, %cst_55 {dimension_numbers = #tpu.dot_dimension_numbers<[1], [0], [0], [1], [0, 0, 1, 1], [], []>} : vector<8x32xf32>, vector<32x128xf32>, vector<8x128xf32> -> vector<8x128xf32>
    %c0_56 = arith.constant 0 : index
    %c0_57 = arith.constant 0 : index
    %c0_58 = arith.constant 0 : index
    %68 = vector.load %arg10[%c0_56, %c0_57, %c0_58] : memref<1x8x128xf32, #tpu.memory_space<vmem>>, vector<1x8x128xf32>
    %69 = vector.shape_cast %68 : vector<1x8x128xf32> to vector<8x128xf32>
    %70 = vector.shape_cast %67 : vector<8x128xf32> to vector<1x8x128xf32>
    tpu.vector_store %arg10[%c0_56, %c0_57, %c0_58], %70 {strides = array<i32>} : memref<1x8x128xf32, #tpu.memory_space<vmem>>, vector<1x8x128xf32>,
    %c0_59 = arith.constant 0 : index
    %c0_60 = arith.constant 0 : index
    %71 = vector.load %arg7[%c0_59, %c0_60] : memref<8x1xf32, #tpu.memory_space<vmem>>, vector<8x1xf32>
    %72 = vector.broadcast %71 : vector<8x1xf32> to vector<8x128xf32>
    %73 = arith.mulf %67, %72 : vector<8x128xf32>
    %c0_61 = arith.constant 0 : index
    %c0_62 = arith.constant 0 : index
    %74 = vector.load %arg8[%c0_61, %c0_62] : memref<8x1xf32, #tpu.memory_space<vmem>>, vector<8x1xf32>
    %75 = vector.broadcast %74 : vector<8x1xf32> to vector<8x128xf32>
    %76 = arith.addf %73, %75 : vector<8x128xf32>
    %cst_63 = arith.constant 0.000000e+00 : f32
    %77 = vector.broadcast %cst_63 : f32 to vector<8x128xf32>
    %78 = arith.maximumf %76, %77 : vector<8x128xf32>
    %c0_64 = arith.constant 0 : index
    %c0_65 = arith.constant 0 : index
    %c0_66 = arith.constant 0 : index
    %79 = vector.load %arg9[%c0_64, %c0_65, %c0_66] : memref<1x8x128xf32, #tpu.memory_space<vmem>>, vector<1x8x128xf32>
    %80 = vector.shape_cast %79 : vector<1x8x128xf32> to vector<8x128xf32>
    %81 = vector.shape_cast %78 : vector<8x128xf32> to vector<1x8x128xf32>
    tpu.vector_store %arg9[%c0_64, %c0_65, %c0_66], %81 {strides = array<i32>} : memref<1x8x128xf32, #tpu.memory_space<vmem>>, vector<1x8x128xf32>,
    return
  }
  func.func @transform_0(%arg0: i32, %arg1: i32) -> (i32, i32, i32, i32, i32) {
    %c0_i32 = arith.constant 0 : i32
    %c0_i32_0 = arith.constant 0 : i32
    %c0_i32_1 = arith.constant 0 : i32
    %c0_i32_2 = arith.constant 0 : i32
    return %arg0, %arg1, %c0_i32, %c0_i32_0, %c0_i32_1 : i32, i32, i32, i32, i32
  }
  func.func @transform_1(%arg0: i32, %arg1: i32) -> (i32, i32, i32, i32) {
    %c0_i32 = arith.constant 0 : i32
    %c0_i32_0 = arith.constant 0 : i32
    %c0_i32_1 = arith.constant 0 : i32
    return %arg0, %c0_i32, %c0_i32_0, %arg1 : i32, i32, i32, i32
  }
  func.func @transform_2(%arg0: i32, %arg1: i32) -> (i32, i32) {
    %c0_i32 = arith.constant 0 : i32
    %c0_i32_0 = arith.constant 0 : i32
    %c0_i32_1 = arith.constant 0 : i32
    return %c0_i32, %c0_i32_0 : i32, i32
  }
  func.func @transform_3(%arg0: i32, %arg1: i32) -> (i32, i32) {
    %c0_i32 = arith.constant 0 : i32
    %c0_i32_0 = arith.constant 0 : i32
    %c0_i32_1 = arith.constant 0 : i32
    return %c0_i32, %c0_i32_0 : i32, i32
  }
  func.func @transform_4(%arg0: i32, %arg1: i32) -> (i32, i32) {
    %c0_i32 = arith.constant 0 : i32
    %c0_i32_0 = arith.constant 0 : i32
    %c0_i32_1 = arith.constant 0 : i32
    return %c0_i32, %c0_i32_0 : i32, i32
  }
  func.func @transform_5(%arg0: i32, %arg1: i32) -> (i32, i32) {
    %c0_i32 = arith.constant 0 : i32
    %c0_i32_0 = arith.constant 0 : i32
    %c0_i32_1 = arith.constant 0 : i32
    return %c0_i32, %c0_i32_0 : i32, i32
  }
  func.func @transform_6(%arg0: i32, %arg1: i32) -> (i32, i32) {
    %c0_i32 = arith.constant 0 : i32
    %c0_i32_0 = arith.constant 0 : i32
    %c0_i32_1 = arith.constant 0 : i32
    return %c0_i32, %c0_i32_0 : i32, i32
  }
  func.func @transform_7(%arg0: i32, %arg1: i32) -> (i32, i32, i32) {
    %c0_i32 = arith.constant 0 : i32
    %c0_i32_0 = arith.constant 0 : i32
    return %arg0, %c0_i32, %arg1 : i32, i32, i32
  }
  func.func @transform_8(%arg0: i32, %arg1: i32) -> (i32, i32, i32) {
    %c0_i32 = arith.constant 0 : i32
    %c0_i32_0 = arith.constant 0 : i32
    return %arg0, %c0_i32, %arg1 : i32, i32, i32
  }
}

</mosaic_0001>

<llo_original>
// kernel: tpu_custom_call.1
$region0: #{tpu_custom_call.1}
  #allocation0 [shape = 'u32[]', space=smem, size = 0x4, offset = 0x4, fixed_abs, tag = 'smem constant byte address 0x4 - core index']
  #allocation1 [shape = 'u32[144,128]{1,0:T(1,128)}', space=vmem, size = 0x12000, scoped, tag = 'internal scratch']
  %s0 = inlined_call_operand.hbm [shape: f32[2,1,2,8,130], index: 0, kind: input, shape index: {}]
  %s1 = inlined_call_operand.hbm [shape: f32[2,2,8,128], index: 1, kind: input, shape index: {}]
  %s2 = inlined_call_operand.vmem [shape: f32[8,24], index: 2, kind: input, shape index: {}]
  %s3 = inlined_call_operand.vmem [shape: f32[8,32], index: 3, kind: input, shape index: {}]
  %s4 = inlined_call_operand.vmem [shape: f32[8,1], index: 4, kind: input, shape index: {}]
  %s5 = inlined_call_operand.vmem [shape: f32[8,1], index: 5, kind: input, shape index: {}]
  %s6 = inlined_call_operand.vmem [shape: f32[8,1], index: 6, kind: input, shape index: {}]
  %s7 = inlined_call_operand.hbm [shape: f32[2,8,128], index: 7, kind: output, shape index: {0}]
  %s8 = inlined_call_operand.hbm [shape: f32[2,8,128], index: 8, kind: output, shape index: {1}]
  %9 = xla_tuple %s7, %s8
  %s10 = sld [smem:[#allocation0]]
  $region77: #{tpu_custom_call.1} parent=0
    _
  %s12 = ssub.s32 1, %s10
  %s13 = scalar_select 0, %s12, %s10
  $region1: #{tpu_custom_call.1} parent=0
    #allocation2 [shape = 'u8[32768]{0}', space=vmem, size = 0x8000, scoped, tag = 'input window, operand 0']
    #allocation3 [shape = 's32[2]{0}', space=sflag, size = 0x8, scoped, tag = 'scoped memory for tpu_custom_call.1']
    #allocation4 [shape = 's32[2]{0}', space=sflag, size = 0x8, scoped, tag = 'scoped memory for tpu_custom_call.1']
    #allocation5 [shape = 'u8[16384]{0}', space=vmem, size = 0x4000, scoped, tag = 'input window, operand 1']
    #allocation6 [shape = 's32[2]{0}', space=sflag, size = 0x8, scoped, tag = 'scoped memory for tpu_custom_call.1']
    #allocation7 [shape = 'u8[8192]{0}', space=vmem, size = 0x2000, scoped, tag = 'output window, operand 0']
    #allocation8 [shape = 'u8[8192]{0}', space=vmem, size = 0x2000, scoped, tag = 'output window, operand 1']
    #allocation9 [shape = 's32[2]{0}', space=sflag, size = 0x8, scoped, tag = 'scoped memory for tpu_custom_call.1']
    %14 = vsyncpa [#allocation3], 0
    %s15 = scalar_lea.sflag [#allocation3], 1
    %16 = vsyncpa %s15, 0
    %17 = vsyncpa [#allocation6], 0
    %s18 = scalar_lea.sflag [#allocation6], 1
    %19 = vsyncpa %s18, 0
    %20 = vsyncpa [#allocation4], 0
    %s21 = scalar_lea.sflag [#allocation4], 1
    %22 = vsyncpa %s21, 0
    %23 = vsyncpa [#allocation9], 0
    %s24 = scalar_lea.sflag [#allocation9], 1
    %25 = vsyncpa %s24, 0
    loop: start=0, step=1, limit=4
    $region2: #{tpu_custom_call.1} parent=1 // loop_pre_header
      _
    $region3: #{tpu_custom_call.1} parent=1 // loop_header
      %s27 = sphi 0, %s31
      %p28 = scmp.ge.s32.totalorder %s27, 4
      %s34 = sphi 0, %s46
      %s35 = sphi 0, %s42
      %s36 = sphi 0, %s34
      %s37 = sphi 0, %s35
      %s38 = sphi 0, %s36
      %s39 = sphi 0, %s37
      %s51 = sphi 0, %s53
      %s54 = sphi 0, %s51
      %s55 = sphi 0, %s54
      %s71 = sphi 0, %s55
      %s79 = sphi 0, %s81
      %s82 = sphi 0, %s79
      %s83 = sphi 0, %s82
      %s99 = sphi 0, %s83
      %s103 = sphi 0, %s103
      %s105 = sphi 0, %s103
      %s106 = sphi 0, %s105
      %s120 = sphi 0, %s106
      %s124 = sphi 0, %s124
      %s126 = sphi 0, %s124
      %s127 = sphi 0, %s126
      %s141 = sphi 0, %s127
      %s145 = sphi 0, %s145
      %s147 = sphi 0, %s145
      %s148 = sphi 0, %s147
      %s162 = sphi 0, %s148
      %s166 = sphi 0, %s166
      %s168 = sphi 0, %s166
      %s169 = sphi 0, %s168
      %s183 = sphi 0, %s169
      %s187 = sphi 0, %s187
      %s189 = sphi 0, %s187
      %s190 = sphi 0, %s189
      %s204 = sphi 0, %s190
      %s212 = sphi 0, %s214
      %s215 = sphi 0, %s212
      %s216 = sphi 0, %s215
      %s232 = sphi 0, %s216
      %s240 = sphi 0, %s242
      %s243 = sphi 0, %s240
      %s244 = sphi 0, %s243
      %s260 = sphi 0, %s244
    $region4: #{tpu_custom_call.1} parent=1 // loop_header_branch
      %30 = sbr.rel (%p28) target = $region8
    $region5: #{tpu_custom_call.1} parent=1 // loop_body
      %s32 = ssub.s32 %s27, 1
      %s33 = ssub.s32 %s27, 2
      %s40 = sadd.s32 1, %s35
      %p41 = scmp.ge.s32.totalorder %s40, 1
      %s42 = scalar_select %p41, 0, %s40
      %s43 = sadd.s32 1, %s34
      %s44 = scalar_select %p41, %s43, %s34
      %p45 = scmp.ge.s32.totalorder %s44, 2
      %s46 = scalar_select %p45, 0, %s44
      %s47 = ssub.s32 %s34, %s46
      %s48 = ssub.s32 %s35, %s42
      %s49 = sor.u32 %s47, %s48
      %p50 = scmp.eq.s32.totalorder %s49, 0
      %s52 = sadd.s32 %s51, 1
      %s53 = scalar_select %p50, %s51, %s52
      %p56 = pneg %p50
      %p57 = scmp.eq.s32.totalorder %s27, 1
      %p58 = por %p56, %p57
      %p59 = scmp.ne.s32.totalorder %s51, %s54
      %p60 = scmp.eq.s32.totalorder %s27, 0
      %p61 = por %p59, %p60
      %p62 = scmp.ne.s32.totalorder %s51, %s54
      %p63 = scmp.eq.s32.totalorder %s32, 1
      %p64 = por %p62, %p63
      %p65 = scmp.ne.s32.totalorder %s54, %s55
      %p66 = scmp.eq.s32.totalorder %s32, 0
      %p67 = por %p65, %p66
      %p68 = scmp.ne.s32.totalorder %s54, %s55
      %p69 = scmp.eq.s32.totalorder %s33, 1
      %p70 = por %p68, %p69
      %p72 = scmp.ne.s32.totalorder %s55, %s71
      %p73 = scmp.eq.s32.totalorder %s33, 0
      %p74 = por %p72, %p73
      %s75 = ssub.s32 %s34, %s46
      %s76 = ssub.s32 %s35, %s42
      %s77 = sor.u32 %s75, %s76
      %p78 = scmp.eq.s32.totalorder %s77, 0
      %s80 = sadd.s32 %s79, 1
      %s81 = scalar_select %p78, %s79, %s80
      %p84 = pneg %p78
      %p85 = scmp.eq.s32.totalorder %s27, 1
      %p86 = por %p84, %p85
      %p87 = scmp.ne.s32.totalorder %s79, %s82
      %p88 = scmp.eq.s32.totalorder %s27, 0
      %p89 = por %p87, %p88
      %p90 = scmp.ne.s32.totalorder %s79, %s82
      %p91 = scmp.eq.s32.totalorder %s32, 1
      %p92 = por %p90, %p91
      %p93 = scmp.ne.s32.totalorder %s82, %s83
      %p94 = scmp.eq.s32.totalorder %s32, 0
      %p95 = por %p93, %p94
      %p96 = scmp.ne.s32.totalorder %s82, %s83
      %p97 = scmp.eq.s32.totalorder %s33, 1
      %p98 = por %p96, %p97
      %p100 = scmp.ne.s32.totalorder %s83, %s99
      %p101 = scmp.eq.s32.totalorder %s33, 0
      %p102 = por %p100, %p101
      %s104 = sadd.s32 %s103, 1
      %p107 = scmp.eq.s32.totalorder %s27, 1
      %p108 = scmp.ne.s32.totalorder %s103, %s105
      %p109 = scmp.eq.s32.totalorder %s27, 0
      %p110 = por %p108, %p109
      %p111 = scmp.ne.s32.totalorder %s103, %s105
      %p112 = scmp.eq.s32.totalorder %s32, 1
      %p113 = por %p111, %p112
      %p114 = scmp.ne.s32.totalorder %s105, %s106
      %p115 = scmp.eq.s32.totalorder %s32, 0
      %p116 = por %p114, %p115
      %p117 = scmp.ne.s32.totalorder %s105, %s106
      %p118 = scmp.eq.s32.totalorder %s33, 1
      %p119 = por %p117, %p118
      %p121 = scmp.ne.s32.totalorder %s106, %s120
      %p122 = scmp.eq.s32.totalorder %s33, 0
      %p123 = por %p121, %p122
      %s125 = sadd.s32 %s124, 1
      %p128 = scmp.eq.s32.totalorder %s27, 1
      %p129 = scmp.ne.s32.totalorder %s124, %s126
      %p130 = scmp.eq.s32.totalorder %s27, 0
      %p131 = por %p129, %p130
      %p132 = scmp.ne.s32.totalorder %s124, %s126
      %p133 = scmp.eq.s32.totalorder %s32, 1
      %p134 = por %p132, %p133
      %p135 = scmp.ne.s32.totalorder %s126, %s127
      %p136 = scmp.eq.s32.totalorder %s32, 0
      %p137 = por %p135, %p136
      %p138 = scmp.ne.s32.totalorder %s126, %s127
      %p139 = scmp.eq.s32.totalorder %s33, 1
      %p140 = por %p138, %p139
      %p142 = scmp.ne.s32.totalorder %s127, %s141
      %p143 = scmp.eq.s32.totalorder %s33, 0
      %p144 = por %p142, %p143
      %s146 = sadd.s32 %s145, 1
      %p149 = scmp.eq.s32.totalorder %s27, 1
      %p150 = scmp.ne.s32.totalorder %s145, %s147
      %p151 = scmp.eq.s32.totalorder %s27, 0
      %p152 = por %p150, %p151
      %p153 = scmp.ne.s32.totalorder %s145, %s147
      %p154 = scmp.eq.s32.totalorder %s32, 1
      %p155 = por %p153, %p154
      %p156 = scmp.ne.s32.totalorder %s147, %s148
      %p157 = scmp.eq.s32.totalorder %s32, 0
      %p158 = por %p156, %p157
      %p159 = scmp.ne.s32.totalorder %s147, %s148
      %p160 = scmp.eq.s32.totalorder %s33, 1
      %p161 = por %p159, %p160
      %p163 = scmp.ne.s32.totalorder %s148, %s162
      %p164 = scmp.eq.s32.totalorder %s33, 0
      %p165 = por %p163, %p164
      %s167 = sadd.s32 %s166, 1
      %p170 = scmp.eq.s32.totalorder %s27, 1
      %p171 = scmp.ne.s32.totalorder %s166, %s168
      %p172 = scmp.eq.s32.totalorder %s27, 0
      %p173 = por %p171, %p172
      %p174 = scmp.ne.s32.totalorder %s166, %s168
      %p175 = scmp.eq.s32.totalorder %s32, 1
      %p176 = por %p174, %p175
      %p177 = scmp.ne.s32.totalorder %s168, %s169
      %p178 = scmp.eq.s32.totalorder %s32, 0
      %p179 = por %p177, %p178
      %p180 = scmp.ne.s32.totalorder %s168, %s169
      %p181 = scmp.eq.s32.totalorder %s33, 1
      %p182 = por %p180, %p181
      %p184 = scmp.ne.s32.totalorder %s169, %s183
      %p185 = scmp.eq.s32.totalorder %s33, 0
      %p186 = por %p184, %p185
      %s188 = sadd.s32 %s187, 1
      %p191 = scmp.eq.s32.totalorder %s27, 1
      %p192 = scmp.ne.s32.totalorder %s187, %s189
      %p193 = scmp.eq.s32.totalorder %s27, 0
      %p194 = por %p192, %p193
      %p195 = scmp.ne.s32.totalorder %s187, %s189
      %p196 = scmp.eq.s32.totalorder %s32, 1
      %p197 = por %p195, %p196
      %p198 = scmp.ne.s32.totalorder %s189, %s190
      %p199 = scmp.eq.s32.totalorder %s32, 0
      %p200 = por %p198, %p199
      %p201 = scmp.ne.s32.totalorder %s189, %s190
      %p202 = scmp.eq.s32.totalorder %s33, 1
      %p203 = por %p201, %p202
      %p205 = scmp.ne.s32.totalorder %s190, %s204
      %p206 = scmp.eq.s32.totalorder %s33, 0
      %p207 = por %p205, %p206
      %s208 = ssub.s32 %s34, %s46
      %s209 = ssub.s32 %s35, %s42
      %s210 = sor.u32 %s208, %s209
      %p211 = scmp.eq.s32.totalorder %s210, 0
      %s213 = sadd.s32 %s212, 1
      %s214 = scalar_select %p211, %s212, %s213
      %p217 = pneg %p211
      %p218 = scmp.eq.s32.totalorder %s27, 1
      %p219 = por %p217, %p218
      %p220 = scmp.ne.s32.totalorder %s212, %s215
      %p221 = scmp.eq.s32.totalorder %s27, 0
      %p222 = por %p220, %p221
      %p223 = scmp.ne.s32.totalorder %s212, %s215
      %p224 = scmp.eq.s32.totalorder %s32, 1
      %p225 = por %p223, %p224
      %p226 = scmp.ne.s32.totalorder %s215, %s216
      %p227 = scmp.eq.s32.totalorder %s32, 0
      %p228 = por %p226, %p227
      %p229 = scmp.ne.s32.totalorder %s215, %s216
      %p230 = scmp.eq.s32.totalorder %s33, 1
      %p231 = por %p229, %p230
      %p233 = scmp.ne.s32.totalorder %s216, %s232
      %p234 = scmp.eq.s32.totalorder %s33, 0
      %p235 = por %p233, %p234
      %s236 = ssub.s32 %s34, %s46
      %s237 = ssub.s32 %s35, %s42
      %s238 = sor.u32 %s236, %s237
      %p239 = scmp.eq.s32.totalorder %s238, 0
      %s241 = sadd.s32 %s240, 1
      %s242 = scalar_select %p239, %s240, %s241
      %p245 = pneg %p239
      %p246 = scmp.eq.s32.totalorder %s27, 1
      %p247 = por %p245, %p246
      %p248 = scmp.ne.s32.totalorder %s240, %s243
      %p249 = scmp.eq.s32.totalorder %s27, 0
      %p250 = por %p248, %p249
      %p251 = scmp.ne.s32.totalorder %s240, %s243
      %p252 = scmp.eq.s32.totalorder %s32, 1
      %p253 = por %p251, %p252
      %p254 = scmp.ne.s32.totalorder %s243, %s244
      %p255 = scmp.eq.s32.totalorder %s32, 0
      %p256 = por %p254, %p255
      %p257 = scmp.ne.s32.totalorder %s243, %s244
      %p258 = scmp.eq.s32.totalorder %s33, 1
      %p259 = por %p257, %p258
      %p261 = scmp.ne.s32.totalorder %s244, %s260
      %p262 = scmp.eq.s32.totalorder %s33, 0
      %p263 = por %p261, %p262
      %p264 = scmp.le.s32.totalorder 1, %s27
      %p265 = scmp.lt.s32.totalorder %s27, 3
      %p266 = pnand %p264, %p265
      %p267 = pneg %p266
      // Predicated region
      $region9: #{tpu_custom_call.1} parent=5 // pred_check
        _
      $region10: #{tpu_custom_call.1} parent=5 // pred_check_branch
        %269 = sbr.rel (%p266) target = $region12
      $region11: #{tpu_custom_call.1} parent=5 // pred_region
        %s270 = ssub.s32 %s27, 1
        // Predicated region
        $region13: #{tpu_custom_call.1} parent=11 // pred_check
          %p271 = pneg %p116
        $region14: #{tpu_custom_call.1} parent=11 // pred_check_branch
          %273 = sbr.rel (%p271) target = $region16
        $region15: #{tpu_custom_call.1} parent=11 // pred_region
          _
        $region16: #{tpu_custom_call.1} parent=11 // pred_fallthru
          _
        // Predicated region
        $region17: #{tpu_custom_call.1} parent=11 // pred_check
          %p274 = pneg %p137
        $region18: #{tpu_custom_call.1} parent=11 // pred_check_branch
          %276 = sbr.rel (%p274) target = $region20
        $region19: #{tpu_custom_call.1} parent=11 // pred_region
          _
        $region20: #{tpu_custom_call.1} parent=11 // pred_fallthru
          _
        // Predicated region
        $region21: #{tpu_custom_call.1} parent=11 // pred_check
          %p277 = pneg %p158
        $region22: #{tpu_custom_call.1} parent=11 // pred_check_branch
          %279 = sbr.rel (%p277) target = $region24
        $region23: #{tpu_custom_call.1} parent=11 // pred_region
          _
        $region24: #{tpu_custom_call.1} parent=11 // pred_fallthru
          _
        // Predicated region
        $region25: #{tpu_custom_call.1} parent=11 // pred_check
          %p280 = pneg %p179
        $region26: #{tpu_custom_call.1} parent=11 // pred_check_branch
          %282 = sbr.rel (%p280) target = $region28
        $region27: #{tpu_custom_call.1} parent=11 // pred_region
          _
        $region28: #{tpu_custom_call.1} parent=11 // pred_fallthru
          _
        // Predicated region
        $region29: #{tpu_custom_call.1} parent=11 // pred_check
          %p283 = pneg %p200
        $region30: #{tpu_custom_call.1} parent=11 // pred_check_branch
          %285 = sbr.rel (%p283) target = $region32
        $region31: #{tpu_custom_call.1} parent=11 // pred_region
          _
        $region32: #{tpu_custom_call.1} parent=11 // pred_fallthru
          _
      $region12: #{tpu_custom_call.1} parent=5 // pred_fallthru
        _
      %p286 = scmp.lt.s32.totalorder %s27, 2
      // Predicated region
      $region33: #{tpu_custom_call.1} parent=5 // pred_check
        %p287 = pneg %p286
      $region34: #{tpu_custom_call.1} parent=5 // pred_check_branch
        %289 = sbr.rel (%p287) target = $region36
      $region35: #{tpu_custom_call.1} parent=5 // pred_region
        // Predicated region
        $region37: #{tpu_custom_call.1} parent=35 // pred_check
          %p290 = pneg %p61
        $region38: #{tpu_custom_call.1} parent=35 // pred_check_branch
          %292 = sbr.rel (%p290) target = $region40
        $region39: #{tpu_custom_call.1} parent=35 // pred_region
          %s293 = sand.u32 %s51, 1
          %s294 = scalar_lea.sflag [#allocation3], %s293
          %s295 = sand.u32 %s51, 1
          %s296 = smul.addr %s295, 32
          %s297 = scalar_lea.vmem [#allocation2], %s296
          %s299 = ssub.s32 512, 512
          %300 = vsyncadd %s294, %s299
          %s301 = smul.addr %s35, 4
          %s302 = smul.addr %s34, 4
          %s303 = sadd.s32 %s301, %s302
          %s304 = smul.addr %s303, 128
          %s305 = scalar_lea.hbm %s0, %s304
          %s306 = sshll.u32 %s297, 4
          %s307 = int_to_ptr.vmem [resolvable:$true] %s306
          %312 = dma.hbm_to_vmem [thread:$0]  %s305, 512, %s307, %s294, 256, 256, 16
        $region40: #{tpu_custom_call.1} parent=35 // pred_fallthru
          _
        // Predicated region
        $region41: #{tpu_custom_call.1} parent=35 // pred_check
          %p313 = pneg %p89
        $region42: #{tpu_custom_call.1} parent=35 // pred_check_branch
          %315 = sbr.rel (%p313) target = $region44
        $region43: #{tpu_custom_call.1} parent=35 // pred_region
          %s316 = sand.u32 %s79, 1
          %s317 = scalar_lea.sflag [#allocation6], %s316
          %s318 = sand.u32 %s79, 1
          %s319 = smul.addr %s318, 16
          %s320 = scalar_lea.vmem [#allocation5], %s319
          %s322 = ssub.s32 256, 256
          %323 = vsyncadd %s317, %s322
          %s324 = smul.addr %s34, 2
          %s325 = sadd.s32 %s35, %s324
          %s326 = smul.addr %s325, 128
          %s327 = scalar_lea.hbm %s1, %s326
          %s328 = sshll.u32 %s320, 4
          %s329 = int_to_ptr.vmem [resolvable:$true] %s328
          %334 = dma.hbm_to_vmem [thread:$0]  %s327, 256, %s329, %s317, 128, 128, 8
        $region44: #{tpu_custom_call.1} parent=35 // pred_fallthru
          _
      $region36: #{tpu_custom_call.1} parent=5 // pred_fallthru
        _
      %p335 = scmp.le.s32.totalorder 1, %s27
      %p336 = scmp.lt.s32.totalorder %s27, 3
      %p337 = pnand %p335, %p336
      %p338 = pneg %p337
      // Predicated region
      $region45: #{tpu_custom_call.1} parent=5 // pred_check
        _
      $region46: #{tpu_custom_call.1} parent=5 // pred_check_branch
        %340 = sbr.rel (%p337) target = $region48
      $region47: #{tpu_custom_call.1} parent=5 // pred_region
        %s341 = ssub.s32 %s27, 1
        %s342 = sand.u32 %s54, 1
        %s343 = scalar_lea.sflag [#allocation3], %s342
        %s344 = sand.u32 %s54, 1
        %s345 = smul.addr %s344, 32
        %s346 = scalar_lea.vmem [#allocation2], %s345
        // Predicated region
        $region49: #{tpu_custom_call.1} parent=47 // pred_check
          %p347 = pneg %p67
        $region50: #{tpu_custom_call.1} parent=47 // pred_check_branch
          %349 = sbr.rel (%p347) target = $region52
        $region51: #{tpu_custom_call.1} parent=47 // pred_region
          %350 = dma.done %s343, 512
        $region52: #{tpu_custom_call.1} parent=47 // pred_fallthru
          _
        %s351 = sand.u32 %s82, 1
        %s352 = scalar_lea.sflag [#allocation6], %s351
        %s353 = sand.u32 %s82, 1
        %s354 = smul.addr %s353, 16
        %s355 = scalar_lea.vmem [#allocation5], %s354
        // Predicated region
        $region53: #{tpu_custom_call.1} parent=47 // pred_check
          %p356 = pneg %p95
        $region54: #{tpu_custom_call.1} parent=47 // pred_check_branch
          %358 = sbr.rel (%p356) target = $region56
        $region55: #{tpu_custom_call.1} parent=47 // pred_region
          %359 = dma.done %s352, 256
        $region56: #{tpu_custom_call.1} parent=47 // pred_fallthru
          _
        %s360 = sand.u32 %s54, 1
        %s361 = scalar_lea.sflag [#allocation3], %s360
        %s362 = sand.u32 %s54, 1
        %s363 = smul.addr %s362, 32
        %s364 = scalar_lea.vmem [#allocation2], %s363
        %p365 = pneg %p67
        %p366 = pneg %p64
        %s367 = sand.u32 %s82, 1
        %s368 = scalar_lea.sflag [#allocation6], %s367
        %s369 = sand.u32 %s82, 1
        %s370 = smul.addr %s369, 16
        %s371 = scalar_lea.vmem [#allocation5], %s370
        %p372 = pneg %p95
        %p373 = pneg %p92
        %p374 = pneg %p116
        %p375 = pneg %p113
        %p376 = pneg %p137
        %p377 = pneg %p134
        %p378 = pneg %p158
        %p379 = pneg %p155
        %p380 = pneg %p179
        %p381 = pneg %p176
        %p382 = pneg %p200
        %p383 = pneg %p197
        %p384 = pneg %p228
        %p385 = pneg %p225
        %s386 = sand.u32 %s215, 1
        %s387 = scalar_lea.sflag [#allocation4], %s386
        %s388 = sand.u32 %s215, 1
        %s389 = smul.addr %s388, 8
        %s390 = scalar_lea.vmem [#allocation7], %s389
        %p391 = pneg %p256
        %p392 = pneg %p253
        %s393 = sand.u32 %s243, 1
        %s394 = scalar_lea.sflag [#allocation9], %s393
        %s395 = sand.u32 %s243, 1
        %s396 = smul.addr %s395, 8
        %s397 = scalar_lea.vmem [#allocation8], %s396
        %s398 = smul.u32 %s37, 256
        %v399 = vlaneseq
        %v400 = vand.u32 %v399, 127
        %v401 = vadd.s32 %v400, 128
        %v402 = vmul.u32 %v400, 2
        %v403 = vmul.u32 %v401, 2
        %s404 = ssub.s32 %s398, 1
        %v405 = vstv %s404
        %v406 = vadd.s32 %v402, %v405
        %v407 = vadd.s32 %v403, %v405
        %v408 = vld [vmem:[%s346] sm:$0xff]
        %v409 = vld [vmem:[%s346 + $0x8] sm:$0xff]
        %s410 = scalar_lea.vmem %s346, 16 [#allocation2]
        %v411 = vld [vmem:[%s410] sm:$0xff]
        %v412 = vld [vmem:[%s410 + $0x8] sm:$0xff]
        %415 = vrot.lane.b32.xlu0 %v408, 127
        %v416 = vpop.permute.xlu0 %415
        %417 = vrot.lane.b32.xlu0 %v409, 127
        %v418 = vpop.permute.xlu0 %417
        %vm419 = vcmask 1039360
        %v420 = vsel %vm419, %v416, %v418
        %v423 = vld [vmem:[%s2] sm:$0xff]
        %v424 = vld [vmem:[%s4] sm:$0xff]
        %426 = vset.pattern.permute.xlu0 0
        %427 = vperm.xlu0 %426, %v424
        %v428 = vpop.permute.xlu0 %427
        %vm430 = vcmask 195584
        %v432 = vsel %vm430, %v423, 0
        %434 = vmatprep.subr.mxu0 %v409
        %435 = vmatpush1.msra.mxu0 %v408
        %436 = vmatprep.subr.mxu0 %v412
        %437 = vmatpush1.msra.mxu0 %v411
        %438 = vmatprep.subr.mxu0 %v418
        %439 = vmatpush1.msra.mxu0 %v420
        %440 = vmatprep.subr.mxu0 0.0
        %441 = vmatpush1.msra.mxu0 0.0
        %442 = vmatprep.subr.mxu0 0.0
        %443 = vmatpush1.msra.mxu0 0.0
        %444 = vmatprep.subr.mxu0 0.0
        %445 = vmatpush1.msra.mxu0 0.0
        %446 = vmatprep.subr.mxu0 0.0
        %447 = vmatpush1.msra.mxu0 0.0
        %448 = vmatprep.subr.mxu0 0.0
        %449 = vmatpush1.msra.mxu0 0.0
        %450 = vmatprep.subr.mxu0 0.0
        %451 = vmatpush1.msra.mxu0 0.0
        %452 = vmatprep.subr.mxu0 0.0
        %453 = vmatpush1.msra.mxu0 0.0
        %454 = vmatprep.subr.mxu0 0.0
        %455 = vmatpush1.msra.mxu0 0.0
        %456 = vmatprep.subr.mxu0 0.0
        %457 = vmatpush1.msra.mxu0 0.0
        %458 = vmatprep.subr.mxu0 0.0
        %459 = vmatpush1.msra.mxu0 0.0
        %460 = vmatprep.subr.mxu0 0.0
        %461 = vmatpush1.msra.mxu0 0.0
        %462 = vmatprep.subr.mxu0 0.0
        %463 = vmatpush1.msra.mxu0 0.0
        %464 = vmatprep.subr.mxu0 0.0
        %465 = vmatpush1.msra.mxu0 0.0
        %466 = vmatprep.subr.mxu0 0.0
        %467 = vmatpush1.msra.mxu0 0.0
        %468 = vmatprep.subr.mxu0 0.0
        %469 = vmatpush1.msra.mxu0 0.0
        %470 = vmatprep.subr.mxu0 0.0
        %471 = vmatpush1.msra.mxu0 0.0
        %472 = vmatprep.subr.mxu0 0.0
        %473 = vmatpush1.msra.mxu0 0.0
        %474 = vmatprep.subr.mxu0 0.0
        %475 = vmatpush1.msra.mxu0 0.0
        %476 = vmatprep.subr.mxu0 0.0
        %477 = vmatpush1.msra.mxu0 0.0
        %478 = vmatprep.subr.mxu0 0.0
        %479 = vmatpush1.msra.mxu0 0.0
        %480 = vmatprep.subr.mxu0 0.0
        %481 = vmatpush1.msra.mxu0 0.0
        %482 = vmatprep.subr.mxu0 0.0
        %483 = vmatpush1.msra.mxu0 0.0
        %484 = vmatprep.subr.mxu0 0.0
        %485 = vmatpush1.msra.mxu0 0.0
        %486 = vmatprep.subr.mxu0 0.0
        %487 = vmatpush1.msra.mxu0 0.0
        %488 = vmatprep.subr.mxu0 0.0
        %489 = vmatpush1.msra.mxu0 0.0
        %490 = vmatprep.subr.mxu0 0.0
        %491 = vmatpush1.msra.mxu0 0.0
        %492 = vmatprep.subr.mxu0 0.0
        %493 = vmatpush1.msra.mxu0 0.0
        %494 = vmatprep.subr.mxu0 0.0
        %495 = vmatpush1.msra.mxu0 0.0
        %496 = vmatprep.subr.mxu0 0.0
        %497 = vmatpush1.msra.mxu0 0.0
        %498 = vmatprep.mubr.f32.mxu0 0.0
        %499 = vmatmul.mubr.f32.gmra.mrb[0].mxu0 %v432
        %v500 = vpop.f32.mrb[0].mxu0
        %v501 = vadd.f32 %v428, %v500
        %v502 = vpop.f32.mrb[0].mxu0
        %v503 = vadd.f32 %v428, %v502
        %504 = vdwg.mxu0
        %v505 = vmax.f32 %v501, 0.0
        %v506 = vmax.f32 %v503, 0.0
        %vm507 = vcmp.ge.s32.totalorder %v406, 0
        %vm508 = vcmp.ge.s32.totalorder %v407, 0
        %vm509 = vcmp.lt.s32.totalorder %v406, 16
        %vm510 = vcmp.lt.s32.totalorder %v407, 16
        %vm511 = vmand %vm507, %vm509
        %vm512 = vmand %vm508, %vm510
        %v513 = vsel %vm511, 1, 0
        %v514 = vsel %vm512, 1, 0
        %vm515 = vcmp.eq.s32.totalorder %v513, 1
        %vm516 = vcmp.eq.s32.totalorder %v514, 1
        %v517 = vsel %vm515, %v505, 0.0
        %v518 = vsel %vm516, %v506, 0.0
        %521 = vrot.lane.b32.xlu0 %v411, 127
        %v522 = vpop.permute.xlu0 %521
        %523 = vrot.lane.b32.xlu0 %v412, 127
        %v524 = vpop.permute.xlu0 %523
        %v525 = vsel %vm419, %v522, %v524
        %528 = vmatprep.subr.mxu0 %v412
        %529 = vmatpush1.msra.mxu0 %v411
        %530 = vmatprep.subr.mxu0 %v418
        %531 = vmatpush1.msra.mxu0 %v420
        %532 = vmatprep.subr.mxu0 %v524
        %533 = vmatpush1.msra.mxu0 %v525
        %534 = vmatprep.subr.mxu0 0.0
        %535 = vmatpush1.msra.mxu0 0.0
        %536 = vmatprep.subr.mxu0 0.0
        %537 = vmatpush1.msra.mxu0 0.0
        %538 = vmatprep.subr.mxu0 0.0
        %539 = vmatpush1.msra.mxu0 0.0
        %540 = vmatprep.subr.mxu0 0.0
        %541 = vmatpush1.msra.mxu0 0.0
        %542 = vmatprep.subr.mxu0 0.0
        %543 = vmatpush1.msra.mxu0 0.0
        %544 = vmatprep.subr.mxu0 0.0
        %545 = vmatpush1.msra.mxu0 0.0
        %546 = vmatprep.subr.mxu0 0.0
        %547 = vmatpush1.msra.mxu0 0.0
        %548 = vmatprep.subr.mxu0 0.0
        %549 = vmatpush1.msra.mxu0 0.0
        %550 = vmatprep.subr.mxu0 0.0
        %551 = vmatpush1.msra.mxu0 0.0
        %552 = vmatprep.subr.mxu0 0.0
        %553 = vmatpush1.msra.mxu0 0.0
        %554 = vmatprep.subr.mxu0 0.0
        %555 = vmatpush1.msra.mxu0 0.0
        %556 = vmatprep.subr.mxu0 0.0
        %557 = vmatpush1.msra.mxu0 0.0
        %558 = vmatprep.subr.mxu0 0.0
        %559 = vmatpush1.msra.mxu0 0.0
        %560 = vmatprep.subr.mxu0 0.0
        %561 = vmatpush1.msra.mxu0 0.0
        %562 = vmatprep.subr.mxu0 0.0
        %563 = vmatpush1.msra.mxu0 0.0
        %564 = vmatprep.subr.mxu0 0.0
        %565 = vmatpush1.msra.mxu0 0.0
        %566 = vmatprep.subr.mxu0 0.0
        %567 = vmatpush1.msra.mxu0 0.0
        %568 = vmatprep.subr.mxu0 0.0
        %569 = vmatpush1.msra.mxu0 0.0
        %570 = vmatprep.subr.mxu0 0.0
        %571 = vmatpush1.msra.mxu0 0.0
        %572 = vmatprep.subr.mxu0 0.0
        %573 = vmatpush1.msra.mxu0 0.0
        %574 = vmatprep.subr.mxu0 0.0
        %575 = vmatpush1.msra.mxu0 0.0
        %576 = vmatprep.subr.mxu0 0.0
        %577 = vmatpush1.msra.mxu0 0.0
        %578 = vmatprep.subr.mxu0 0.0
        %579 = vmatpush1.msra.mxu0 0.0
        %580 = vmatprep.subr.mxu0 0.0
        %581 = vmatpush1.msra.mxu0 0.0
        %582 = vmatprep.subr.mxu0 0.0
        %583 = vmatpush1.msra.mxu0 0.0
        %584 = vmatprep.subr.mxu0 0.0
        %585 = vmatpush1.msra.mxu0 0.0
        %586 = vmatprep.subr.mxu0 0.0
        %587 = vmatpush1.msra.mxu0 0.0
        %588 = vmatprep.subr.mxu0 0.0
        %589 = vmatpush1.msra.mxu0 0.0
        %590 = vmatprep.subr.mxu0 0.0
        %591 = vmatpush1.msra.mxu0 0.0
        %592 = vmatprep.mubr.f32.mxu0 0.0
        %593 = vmatmul.mubr.f32.gmra.mrb[0].mxu0 %v432
        %v594 = vpop.f32.mrb[0].mxu0
        %v595 = vadd.f32 %v428, %v594
        %v596 = vpop.f32.mrb[0].mxu0
        %597 = vdwg.mxu0
        %v598 = vmax.f32 %v595, 0.0
        %v599 = vadd.s32 %v406, 1
        %vm600 = vcmp.ge.s32.totalorder %v599, 0
        %vm601 = vcmp.lt.s32.totalorder %v599, 16
        %vm602 = vmand %vm600, %vm601
        %v603 = vsel %vm602, 1, 0
        %vm604 = vcmp.eq.s32.totalorder %v603, 1
        %v605 = vsel %vm604, %v598, 0.0
        %v606 = vld [vmem:[%s355] sm:$0xff]
        %s607 = scalar_lea.vmem %s355, 8 [#allocation5]
        %v608 = vld [vmem:[%s607] sm:$0xff]
        %v609 = vmax.f32 %v606, %v608
        %612 = vrot.lane.b32.xlu0 %v517, 127
        %v613 = vpop.permute.xlu0 %612
        %614 = vrot.lane.b32.xlu0 %v518, 127
        %v615 = vpop.permute.xlu0 %614
        %v616 = vsel %vm419, %v613, %v615
        %v618 = vld [vmem:[%s3] sm:$0xff]
        %vm619 = vcmask 261120
        %v621 = vsel %vm619, %v618, 0
        %623 = vmatprep.subr.mxu0 0.0
        %624 = vmatpush1.msra.mxu0 %v517
        %625 = vmatprep.subr.mxu0 0.0
        %626 = vmatpush1.msra.mxu0 %v605
        %627 = vmatprep.subr.mxu0 0.0
        %628 = vmatpush1.msra.mxu0 %v616
        %629 = vmatprep.subr.mxu0 0.0
        %630 = vmatpush1.msra.mxu0 %v609
        %631 = vmatprep.subr.mxu0 0.0
        %632 = vmatpush1.msra.mxu0 0.0
        %633 = vmatprep.subr.mxu0 0.0
        %634 = vmatpush1.msra.mxu0 0.0
        %635 = vmatprep.subr.mxu0 0.0
        %636 = vmatpush1.msra.mxu0 0.0
        %637 = vmatprep.subr.mxu0 0.0
        %638 = vmatpush1.msra.mxu0 0.0
        %639 = vmatprep.subr.mxu0 0.0
        %640 = vmatpush1.msra.mxu0 0.0
        %641 = vmatprep.subr.mxu0 0.0
        %642 = vmatpush1.msra.mxu0 0.0
        %643 = vmatprep.subr.mxu0 0.0
        %644 = vmatpush1.msra.mxu0 0.0
        %645 = vmatprep.subr.mxu0 0.0
        %646 = vmatpush1.msra.mxu0 0.0
        %647 = vmatprep.subr.mxu0 0.0
        %648 = vmatpush1.msra.mxu0 0.0
        %649 = vmatprep.subr.mxu0 0.0
        %650 = vmatpush1.msra.mxu0 0.0
        %651 = vmatprep.subr.mxu0 0.0
        %652 = vmatpush1.msra.mxu0 0.0
        %653 = vmatprep.subr.mxu0 0.0
        %654 = vmatpush1.msra.mxu0 0.0
        %655 = vmatprep.subr.mxu0 0.0
        %656 = vmatpush1.msra.mxu0 0.0
        %657 = vmatprep.subr.mxu0 0.0
        %658 = vmatpush1.msra.mxu0 0.0
        %659 = vmatprep.subr.mxu0 0.0
        %660 = vmatpush1.msra.mxu0 0.0
        %661 = vmatprep.subr.mxu0 0.0
        %662 = vmatpush1.msra.mxu0 0.0
        %663 = vmatprep.subr.mxu0 0.0
        %664 = vmatpush1.msra.mxu0 0.0
        %665 = vmatprep.subr.mxu0 0.0
        %666 = vmatpush1.msra.mxu0 0.0
        %667 = vmatprep.subr.mxu0 0.0
        %668 = vmatpush1.msra.mxu0 0.0
        %669 = vmatprep.subr.mxu0 0.0
        %670 = vmatpush1.msra.mxu0 0.0
        %671 = vmatprep.subr.mxu0 0.0
        %672 = vmatpush1.msra.mxu0 0.0
        %673 = vmatprep.subr.mxu0 0.0
        %674 = vmatpush1.msra.mxu0 0.0
        %675 = vmatprep.subr.mxu0 0.0
        %676 = vmatpush1.msra.mxu0 0.0
        %677 = vmatprep.subr.mxu0 0.0
        %678 = vmatpush1.msra.mxu0 0.0
        %679 = vmatprep.subr.mxu0 0.0
        %680 = vmatpush1.msra.mxu0 0.0
        %681 = vmatprep.subr.mxu0 0.0
        %682 = vmatpush1.msra.mxu0 0.0
        %683 = vmatprep.subr.mxu0 0.0
        %684 = vmatpush1.msra.mxu0 0.0
        %685 = vmatprep.subr.mxu0 0.0
        %686 = vmatpush1.msra.mxu0 0.0
        %687 = vmatprep.mubr.f32.mxu0 0.0
        %688 = vmatmul.mubr.f32.gmra.mrb[0].mxu0 %v621
        %v689 = vpop.f32.mrb[0].mxu0
        %v690 = vadd.f32 0.0, %v689
        %v691 = vpop.f32.mrb[0].mxu0
        %692 = vdwg.mxu0
        %693 = vst [vmem:[%s397] sm:$0xff] %v690
        %v694 = vld [vmem:[%s5] sm:$0xff]
        %696 = vset.pattern.permute.xlu0 0
        %697 = vperm.xlu0 %696, %v694
        %v698 = vpop.permute.xlu0 %697
        %v700 = vmul.f32 %v690, %v698
        %v701 = vld [vmem:[%s6] sm:$0xff]
        %703 = vset.pattern.permute.xlu0 0
        %704 = vperm.xlu0 %703, %v701
        %v705 = vpop.permute.xlu0 %704
        %v707 = vadd.f32 %v700, %v705
        %v708 = vmax.f32 %v707, 0.0
        %709 = vst [vmem:[%s390] sm:$0xff] %v708
        %s710 = sand.u32 %s215, 1
        %s711 = scalar_lea.sflag [#allocation4], %s710
        %s712 = sand.u32 %s215, 1
        %s713 = smul.addr %s712, 8
        %s714 = scalar_lea.vmem [#allocation7], %s713
        %s715 = sand.u32 %s243, 1
        %s716 = scalar_lea.sflag [#allocation9], %s715
        %s717 = sand.u32 %s243, 1
        %s718 = smul.addr %s717, 8
        %s719 = scalar_lea.vmem [#allocation8], %s718
        // Predicated region
        $region57: #{tpu_custom_call.1} parent=47 // pred_check
          %p720 = pneg %p225
        $region58: #{tpu_custom_call.1} parent=47 // pred_check_branch
          %722 = sbr.rel (%p720) target = $region60
        $region59: #{tpu_custom_call.1} parent=47 // pred_region
          %s724 = ssub.s32 128, 128
          %725 = vsyncadd %s711, %s724
          %s726 = sadd.s32 %s37, %s36
          %s727 = smul.addr %s726, 128
          %s728 = scalar_lea.hbm %s7, %s727
          %s730 = sshll.u32 %s714, 4
          %s731 = int_to_ptr.vmem [resolvable:$true] %s730
          %733 = dma.vmem_to_hbm [thread:$0]  %s731, 128, %s728, %s711
        $region60: #{tpu_custom_call.1} parent=47 // pred_fallthru
          _
        // Predicated region
        $region61: #{tpu_custom_call.1} parent=47 // pred_check
          %p734 = pneg %p253
        $region62: #{tpu_custom_call.1} parent=47 // pred_check_branch
          %736 = sbr.rel (%p734) target = $region64
        $region63: #{tpu_custom_call.1} parent=47 // pred_region
          %s738 = ssub.s32 128, 128
          %739 = vsyncadd %s716, %s738
          %s740 = sadd.s32 %s37, %s36
          %s741 = smul.addr %s740, 128
          %s742 = scalar_lea.hbm %s8, %s741
          %s744 = sshll.u32 %s719, 4
          %s745 = int_to_ptr.vmem [resolvable:$true] %s744
          %747 = dma.vmem_to_hbm [thread:$0]  %s745, 128, %s742, %s716
        $region64: #{tpu_custom_call.1} parent=47 // pred_fallthru
          _
      $region48: #{tpu_custom_call.1} parent=5 // pred_fallthru
        _
      %p748 = scmp.le.s32.totalorder 2, %s27
      // Predicated region
      $region65: #{tpu_custom_call.1} parent=5 // pred_check
        %p749 = pneg %p748
      $region66: #{tpu_custom_call.1} parent=5 // pred_check_branch
        %751 = sbr.rel (%p749) target = $region68
      $region67: #{tpu_custom_call.1} parent=5 // pred_region
        %s752 = ssub.s32 %s27, 2
        // Predicated region
        $region69: #{tpu_custom_call.1} parent=67 // pred_check
          %p753 = pneg %p231
        $region70: #{tpu_custom_call.1} parent=67 // pred_check_branch
          %755 = sbr.rel (%p753) target = $region72
        $region71: #{tpu_custom_call.1} parent=67 // pred_region
          %s756 = sand.u32 %s216, 1
          %s757 = scalar_lea.sflag [#allocation4], %s756
          %s758 = sand.u32 %s216, 1
          %s759 = smul.addr %s758, 8
          %s760 = scalar_lea.vmem [#allocation7], %s759
          %761 = dma.done %s757, 128
        $region72: #{tpu_custom_call.1} parent=67 // pred_fallthru
          _
        // Predicated region
        $region73: #{tpu_custom_call.1} parent=67 // pred_check
          %p762 = pneg %p259
        $region74: #{tpu_custom_call.1} parent=67 // pred_check_branch
          %764 = sbr.rel (%p762) target = $region76
        $region75: #{tpu_custom_call.1} parent=67 // pred_region
          %s765 = sand.u32 %s244, 1
          %s766 = scalar_lea.sflag [#allocation9], %s765
          %s767 = sand.u32 %s244, 1
          %s768 = smul.addr %s767, 8
          %s769 = scalar_lea.vmem [#allocation8], %s768
          %770 = dma.done %s766, 128
        $region76: #{tpu_custom_call.1} parent=67 // pred_fallthru
          _
      $region68: #{tpu_custom_call.1} parent=5 // pred_fallthru
        _
    $region6: #{tpu_custom_call.1} parent=1 // loop_footer
      %s31 = sadd.s32 1, %s27
    $region7: #{tpu_custom_call.1} parent=1 // loop_footer_branch
      %26 = sbr.rel target = $region3
    $region8: #{tpu_custom_call.1} parent=1 // loop_exit
      _
    %771 = vsyncpa [#allocation3], 1
    %s772 = scalar_lea.sflag [#allocation3], 1
    %773 = vsyncpa %s772, 1
    %774 = vsyncpa [#allocation6], 1
    %s775 = scalar_lea.sflag [#allocation6], 1
    %776 = vsyncpa %s775, 1
    %777 = vsyncpa [#allocation4], 1
    %s778 = scalar_lea.sflag [#allocation4], 1
    %779 = vsyncpa %s778, 1
    %780 = vsyncpa [#allocation9], 1
    %s781 = scalar_lea.sflag [#allocation9], 1
    %782 = vsyncpa %s781, 1

</llo_original>
